<compile_context>
chip_gen: v7x
topology: tpu7x:2x2x1
jax: 0.10.0
libtpu: 0.0.40
codegen_flags: <defaults>
</compile_context>

<pallas_src>
import jax
import jax.numpy as jnp
from jax.experimental import pallas as pl
from jax.experimental.pallas import tpu as pltpu

# ---- static problem sizes (consistent with the module) ----
BATCH = 2
SEQ = 8
D_MODEL = 128                 # d_model (lane-dense)
M_ROWS = BATCH * SEQ          # 16 rows -> (16, 128) tiles


def gru_gate_kernel(yx_ref, x_ref, w_ref, ug_ref, bz_ref, out_ref):
    """Fused GRU gate.

    yx_ref : (M, 2D) bf16   [y | x]           (stacked MXU LHS, K = 2D = 256)
    x_ref  : (M, D)  f32    x (for r*x and the final blend)
    w_ref  : (2D, 3D) bf16  [[W_z.T | W_r.T | W_g.T],
                             [U_z.T | U_r.T |  0   ]]
    ug_ref : (D, D)  bf16   U_g.T
    bz_ref : (1, D)  f32    bias of linear_w_z
    out_ref: (M, D)  f32
    """
    D = out_ref.shape[-1]
    x = x_ref[...]                                                    # (M, D) f32

    # One K=256 bf16 MXU matmul covers 5 of the 6 Linear layers; f32 accumulate.
    # Columns: [W_z y + U_z x | W_r y + U_r x | W_g y]
    pre = jnp.dot(yx_ref[...], w_ref[...],
                  preferred_element_type=jnp.float32)                 # (M, 3D) f32

    z = jax.nn.sigmoid(pre[:, 0:D] + bz_ref[...])                     # (M, D)
    r = jax.nn.sigmoid(pre[:, D:2 * D])                               # (M, D)

    # Second (dependent) MXU matmul: U_g (r * x), bf16 operands, f32 accumulate.
    g = jnp.dot((r * x).astype(jnp.bfloat16), ug_ref[...],
                preferred_element_type=jnp.float32)                   # (M, D)
    h_hat = jnp.tanh(pre[:, 2 * D:3 * D] + g)                         # (M, D)

    # (1-z)*x + z*h_hat  ==  x + z*(h_hat - x): saves one VPU op per vreg.
    # Single lane-dense unmasked (M, 128) store.
    out_ref[...] = x + z * (h_hat - x)


@jax.jit
def gru_gate_forward(x, y, w_yx, ug_t, bz_row):
    """x, y: (BATCH, SEQ, D_MODEL) f32. Packed params from pack_params()."""
    b, s, d = x.shape
    m = b * s
    x2 = x.reshape(m, d)
    # Stacked bf16 LHS [y | x] built once in the (fused) XLA wrapper.
    yx = jnp.concatenate([y.reshape(m, d), x2], axis=1).astype(jnp.bfloat16)

    out = pl.pallas_call(
        gru_gate_kernel,
        out_shape=jax.ShapeDtypeStruct((m, d), jnp.float32),
        grid_spec=pltpu.PrefetchScalarGridSpec(
            num_scalar_prefetch=0,
            grid=(1,),
            in_specs=[
                pl.BlockSpec((m, 2 * d), lambda i: (0, 0)),      # [y|x] bf16
                pl.BlockSpec((m, d), lambda i: (0, 0)),          # x f32
                pl.BlockSpec((2 * d, 3 * d), lambda i: (0, 0)),  # packed W bf16
                pl.BlockSpec((d, d), lambda i: (0, 0)),          # U_g.T bf16
                pl.BlockSpec((1, d), lambda i: (0, 0)),          # b_z f32
            ],
            out_specs=pl.BlockSpec((m, d), lambda i: (0, 0)),
        ),
        compiler_params=pltpu.CompilerParams(
            dimension_semantics=("arbitrary",)),
    )(yx, x2, w_yx, ug_t, bz_row)
    return out.reshape(b, s, d)


def pack_params(w_r, u_r, w_z, b_z, u_z, w_g, u_g):
    """One-time host-side packing of the six torch-layout (out,in) weights.

    Returns:
      w_yx  : (2D, 3D) bf16  stacked RHS for the K=256 matmul
      ug_t  : (D, D)   bf16  U_g.T
      bz_row: (1, D)   f32   W_z bias
    """
    D = w_z.shape[0]
    top = jnp.concatenate([w_z.T, w_r.T, w_g.T], axis=1)              # (D, 3D)
    bot = jnp.concatenate([u_z.T, u_r.T,
                           jnp.zeros((D, D), jnp.float32)], axis=1)   # (D, 3D)
    w_yx = jnp.concatenate([top, bot], axis=0).astype(jnp.bfloat16)   # (2D, 3D)
    ug_t = u_g.T.astype(jnp.bfloat16)                                 # (D, D)
    bz_row = b_z.reshape(1, -1).astype(jnp.float32)                   # (1, D)
    return w_yx, ug_t, bz_row


def reference_forward(x, y, w_r, u_r, w_z, b_z, u_z, w_g, u_g):
    """Pure-JAX f32 mirror of PyTorch GRUGate.forward (torch (out,in) layout)."""
    z = jax.nn.sigmoid(y @ w_z.T + b_z + x @ u_z.T)
    r = jax.nn.sigmoid(y @ w_r.T + x @ u_r.T)
    h_hat = jnp.tanh(y @ w_g.T + (r * x) @ u_g.T)
    return (1.0 - z) * x + z * h_hat


if __name__ == "__main__":
    key = jax.random.PRNGKey(0)
    keys = jax.random.split(key, 8)

    D = D_MODEL
    std = (1.0 / D) ** 0.5
    # six Linear weights in torch layout (out_features, in_features)
    w_r = std * jax.random.normal(keys[0], (D, D), dtype=jnp.float32)
    u_r = std * jax.random.normal(keys[1], (D, D), dtype=jnp.float32)
    w_z = std * jax.random.normal(keys[2], (D, D), dtype=jnp.float32)
    u_z = std * jax.random.normal(keys[3], (D, D), dtype=jnp.float32)
    w_g = std * jax.random.normal(keys[4], (D, D), dtype=jnp.float32)
    u_g = std * jax.random.normal(keys[5], (D, D), dtype=jnp.float32)
    b_z = jnp.full((D,), -2.0, dtype=jnp.float32)   # init_bias(): bias.fill_(-2)

    x = jax.random.normal(keys[6], (BATCH, SEQ, D), dtype=jnp.float32)
    y = jax.random.normal(keys[7], (BATCH, SEQ, D), dtype=jnp.float32)

    w_yx, ug_t, bz_row = pack_params(w_r, u_r, w_z, b_z, u_z, w_g, u_g)

    out = gru_gate_forward(x, y, w_yx, ug_t, bz_row)
    out = jax.block_until_ready(out)

    ref = reference_forward(x, y, w_r, u_r, w_z, b_z, u_z, w_g, u_g)
    assert out.shape == (BATCH, SEQ, D)
    # bf16 weights/activations on the MXU path -> loosened tolerance vs f32 ref.
    assert jnp.allclose(out, ref, atol=3e-2, rtol=3e-2), \
        f"max abs err {jnp.max(jnp.abs(out - ref))}"

    print("KERNEL_OK")
</pallas_src>

<mosaic_0001>
module attributes {stable_mosaic.version = 11 : i64} {
  func.func @gru_gate_kernel(%arg0: i32, %arg1: memref<16x256xbf16, #tpu.memory_space<vmem>>, %arg2: memref<16x128xf32, #tpu.memory_space<vmem>>, %arg3: memref<256x384xbf16, #tpu.memory_space<vmem>>, %arg4: memref<128x128xbf16, #tpu.memory_space<vmem>>, %arg5: memref<1x128xf32, #tpu.memory_space<vmem>>, %arg6: memref<16x128xf32, #tpu.memory_space<vmem>>) attributes {dimension_semantics = [#tpu.dimension_semantics<arbitrary>], iteration_bounds = array<i64: 1>, scalar_prefetch = 0 : i64, scratch_operands = 0 : i64, tpu.core_type = #tpu.core_type<tc>, window_params = [{pipeline_mode = #tpu.pipeline_mode<synchronous>, transform_indices = @transform_0, window_bounds = array<i64: 16, 256>}, {pipeline_mode = #tpu.pipeline_mode<synchronous>, transform_indices = @transform_1, window_bounds = array<i64: 16, 128>}, {pipeline_mode = #tpu.pipeline_mode<synchronous>, transform_indices = @transform_2, window_bounds = array<i64: 256, 384>}, {pipeline_mode = #tpu.pipeline_mode<synchronous>, transform_indices = @transform_3, window_bounds = array<i64: 128, 128>}, {pipeline_mode = #tpu.pipeline_mode<synchronous>, transform_indices = @transform_4, window_bounds = array<i64: 1, 128>}, {pipeline_mode = #tpu.pipeline_mode<synchronous>, transform_indices = @transform_5, window_bounds = array<i64: 16, 128>}]} {
    %c0 = arith.constant 0 : index
    %c0_0 = arith.constant 0 : index
    %0 = vector.load %arg2[%c0, %c0_0] : memref<16x128xf32, #tpu.memory_space<vmem>>, vector<16x128xf32>
    %c0_1 = arith.constant 0 : index
    %c0_2 = arith.constant 0 : index
    %1 = vector.load %arg1[%c0_1, %c0_2] : memref<16x256xbf16, #tpu.memory_space<vmem>>, vector<16x256xbf16>
    %c0_3 = arith.constant 0 : index
    %c0_4 = arith.constant 0 : index
    %2 = vector.load %arg3[%c0_3, %c0_4] : memref<256x384xbf16, #tpu.memory_space<vmem>>, vector<256x384xbf16>
    %cst = arith.constant dense<0.000000e+00> : vector<16x384xf32>
    %3 = tpu.matmul %1, %2, %cst {dimension_numbers = #tpu.dot_dimension_numbers<[1], [0], [0], [1], [0, 0, 1, 1], [], []>} : vector<16x256xbf16>, vector<256x384xbf16>, vector<16x384xf32> -> vector<16x384xf32>
    %4 = vector.extract_strided_slice %3 {offsets = [0, 0], sizes = [16, 128], strides = [1, 1]} : vector<16x384xf32> to vector<16x128xf32>
    %c0_5 = arith.constant 0 : index
    %c0_6 = arith.constant 0 : index
    %5 = vector.load %arg5[%c0_5, %c0_6] : memref<1x128xf32, #tpu.memory_space<vmem>>, vector<1x128xf32>
    %6 = vector.broadcast %5 : vector<1x128xf32> to vector<16x128xf32>
    %7 = arith.addf %4, %6 : vector<16x128xf32>
    %8 = arith.negf %7 : vector<16x128xf32>
    %9 = math.exp %8 : vector<16x128xf32>
    %cst_7 = arith.constant 1.000000e+00 : f32
    %10 = vector.broadcast %cst_7 : f32 to vector<16x128xf32>
    %11 = arith.addf %10, %9 : vector<16x128xf32>
    %12 = arith.divf %10, %11 : vector<16x128xf32>
    %13 = vector.extract_strided_slice %3 {offsets = [0, 128], sizes = [16, 128], strides = [1, 1]} : vector<16x384xf32> to vector<16x128xf32>
    %14 = arith.negf %13 : vector<16x128xf32>
    %15 = math.exp %14 : vector<16x128xf32>
    %cst_8 = arith.constant 1.000000e+00 : f32
    %16 = vector.broadcast %cst_8 : f32 to vector<16x128xf32>
    %17 = arith.addf %16, %15 : vector<16x128xf32>
    %18 = arith.divf %16, %17 : vector<16x128xf32>
    %19 = arith.mulf %18, %0 : vector<16x128xf32>
    %20 = arith.truncf %19 : vector<16x128xf32> to vector<16x128xbf16>
    %c0_9 = arith.constant 0 : index
    %c0_10 = arith.constant 0 : index
    %21 = vector.load %arg4[%c0_9, %c0_10] : memref<128x128xbf16, #tpu.memory_space<vmem>>, vector<128x128xbf16>
    %cst_11 = arith.constant dense<0.000000e+00> : vector<16x128xf32>
    %22 = tpu.matmul %20, %21, %cst_11 {dimension_numbers = #tpu.dot_dimension_numbers<[1], [0], [0], [1], [0, 0, 1, 1], [], []>} : vector<16x128xbf16>, vector<128x128xbf16>, vector<16x128xf32> -> vector<16x128xf32>
    %23 = vector.extract_strided_slice %3 {offsets = [0, 256], sizes = [16, 128], strides = [1, 1]} : vector<16x384xf32> to vector<16x128xf32>
    %24 = arith.addf %23, %22 : vector<16x128xf32>
    %25 = math.tanh %24 : vector<16x128xf32>
    %26 = arith.subf %25, %0 : vector<16x128xf32>
    %27 = arith.mulf %12, %26 : vector<16x128xf32>
    %28 = arith.addf %0, %27 : vector<16x128xf32>
    %c0_12 = arith.constant 0 : index
    %c0_13 = arith.constant 0 : index
    %29 = vector.load %arg6[%c0_12, %c0_13] : memref<16x128xf32, #tpu.memory_space<vmem>>, vector<16x128xf32>
    tpu.vector_store %arg6[%c0_12, %c0_13], %28 {strides = array<i32>} : memref<16x128xf32, #tpu.memory_space<vmem>>, vector<16x128xf32>,
    return
  }
  func.func @transform_0(%arg0: i32) -> (i32, i32) {
    %c0_i32 = arith.constant 0 : i32
    %c0_i32_0 = arith.constant 0 : i32
    %c0_i32_1 = arith.constant 0 : i32
    return %c0_i32, %c0_i32_0 : i32, i32
  }
  func.func @transform_1(%arg0: i32) -> (i32, i32) {
    %c0_i32 = arith.constant 0 : i32
    %c0_i32_0 = arith.constant 0 : i32
    %c0_i32_1 = arith.constant 0 : i32
    return %c0_i32, %c0_i32_0 : i32, i32
  }
  func.func @transform_2(%arg0: i32) -> (i32, i32) {
    %c0_i32 = arith.constant 0 : i32
    %c0_i32_0 = arith.constant 0 : i32
    %c0_i32_1 = arith.constant 0 : i32
    return %c0_i32, %c0_i32_0 : i32, i32
  }
  func.func @transform_3(%arg0: i32) -> (i32, i32) {
    %c0_i32 = arith.constant 0 : i32
    %c0_i32_0 = arith.constant 0 : i32
    %c0_i32_1 = arith.constant 0 : i32
    return %c0_i32, %c0_i32_0 : i32, i32
  }
  func.func @transform_4(%arg0: i32) -> (i32, i32) {
    %c0_i32 = arith.constant 0 : i32
    %c0_i32_0 = arith.constant 0 : i32
    %c0_i32_1 = arith.constant 0 : i32
    return %c0_i32, %c0_i32_0 : i32, i32
  }
  func.func @transform_5(%arg0: i32) -> (i32, i32) {
    %c0_i32 = arith.constant 0 : i32
    %c0_i32_0 = arith.constant 0 : i32
    %c0_i32_1 = arith.constant 0 : i32
    return %c0_i32, %c0_i32_0 : i32, i32
  }
}

</mosaic_0001>

<llo_original>
// kernel: gru_gate_forward.1
$region0: #{gru_gate_forward.1}
  #allocation0 [shape = 'u32[]', space=smem, size = 0x4, offset = 0x4, fixed_abs, tag = 'smem constant byte address 0x4 - core index']
  #allocation1 [shape = 'u32[144,128]{1,0:T(1,128)}', space=vmem, size = 0x12000, scoped, tag = 'internal scratch']
  %s0 = inlined_call_operand.vmem [shape: bf16[16,256], index: 0, kind: input, shape index: {}]
  %s1 = inlined_call_operand.vmem [shape: f32[16,128], index: 1, kind: input, shape index: {}]
  %s2 = inlined_call_operand.hbm [shape: bf16[256,384], index: 2, kind: input, shape index: {}]
  %s3 = inlined_call_operand.vmem [shape: bf16[128,128], index: 3, kind: input, shape index: {}]
  %s4 = inlined_call_operand.vmem [shape: f32[1,128], index: 4, kind: input, shape index: {}]
  %s5 = inlined_call_operand.hbm [shape: f32[16,128], index: 5, kind: output, shape index: {}]
  %s6 = sld [smem:[#allocation0]]
  $region34: #{gru_gate_forward.1} parent=0
    _
  %s8 = ssub.s32 1, %s6
  %s9 = scalar_select 0, %s8, %s6
  $region1: #{gru_gate_forward.1} parent=0
    #allocation2 [shape = 'u8[196608]{0}', space=vmem, size = 0x30000, scoped, tag = 'input window, operand 2, single buffered']
    #allocation3 [shape = 's32[1]{0}', space=sflag, size = 0x4, scoped, tag = 'scoped memory for gru_gate_forward.1']
    #allocation4 [shape = 's32[1]{0}', space=sflag, size = 0x4, scoped, tag = 'scoped memory for gru_gate_forward.1']
    #allocation5 [shape = 'u8[8192]{0}', space=vmem, size = 0x2000, scoped, tag = 'output window, operand 0, single buffered']
    %10 = vsyncpa [#allocation3], 0
    %11 = vsyncpa [#allocation4], 0
    // Predicated region
    $region2: #{gru_gate_forward.1} parent=1 // pred_check
      _
    $region3: #{gru_gate_forward.1} parent=1 // pred_check_branch
      %13 = sbr.rel (0) target = $region5
    $region4: #{gru_gate_forward.1} parent=1 // pred_region
      _
    $region5: #{gru_gate_forward.1} parent=1 // pred_fallthru
      _
    // Predicated region
    $region6: #{gru_gate_forward.1} parent=1 // pred_check
      _
    $region7: #{gru_gate_forward.1} parent=1 // pred_check_branch
      %15 = sbr.rel (0) target = $region9
    $region8: #{gru_gate_forward.1} parent=1 // pred_region
      _
    $region9: #{gru_gate_forward.1} parent=1 // pred_fallthru
      _
    // Predicated region
    $region10: #{gru_gate_forward.1} parent=1 // pred_check
      _
    $region11: #{gru_gate_forward.1} parent=1 // pred_check_branch
      %17 = sbr.rel (0) target = $region13
    $region12: #{gru_gate_forward.1} parent=1 // pred_region
      %s19 = ssub.s32 6144, 6144
      %20 = vsyncadd [#allocation3], %s19
      %s21 = sshll.u32 [#allocation2], 4
      %s22 = int_to_ptr.vmem [resolvable:$true] %s21
      %27 = dma.hbm_to_vmem [thread:$0]  %s2, 6144, %s22, [#allocation3], 192, 192, 12
    $region13: #{gru_gate_forward.1} parent=1 // pred_fallthru
      _
    // Predicated region
    $region14: #{gru_gate_forward.1} parent=1 // pred_check
      _
    $region15: #{gru_gate_forward.1} parent=1 // pred_check_branch
      %29 = sbr.rel (0) target = $region17
    $region16: #{gru_gate_forward.1} parent=1 // pred_region
      _
    $region17: #{gru_gate_forward.1} parent=1 // pred_fallthru
      _
    // Predicated region
    $region18: #{gru_gate_forward.1} parent=1 // pred_check
      _
    $region19: #{gru_gate_forward.1} parent=1 // pred_check_branch
      %31 = sbr.rel (0) target = $region21
    $region20: #{gru_gate_forward.1} parent=1 // pred_region
      _
    $region21: #{gru_gate_forward.1} parent=1 // pred_fallthru
      _
    // Predicated region
    $region22: #{gru_gate_forward.1} parent=1 // pred_check
      _
    $region23: #{gru_gate_forward.1} parent=1 // pred_check_branch
      %33 = sbr.rel (0) target = $region25
    $region24: #{gru_gate_forward.1} parent=1 // pred_region
      %34 = dma.done [#allocation3], 6144
    $region25: #{gru_gate_forward.1} parent=1 // pred_fallthru
      _
    %v36 = vld [vmem:[%s1] sm:$0xff]
    %v37 = vld [vmem:[%s1 + $0x8] sm:$0xff]
    %v38 = vld [vmem:[%s0] sm:$0xff]
    %v39 = vld [vmem:[%s0 + $0x8] sm:$0xff]
    %v40 = vld [vmem:[#allocation2] sm:$0xff]
    %v41 = vld [vmem:[#allocation2 + $0x8] sm:$0xf]
    %v42 = vld [vmem:[#allocation2 + $0xc] sm:$0xff]
    %v43 = vld [vmem:[#allocation2 + $0x14] sm:$0xf]
    %v44 = vld [vmem:[#allocation2 + $0x18] sm:$0xff]
    %v45 = vld [vmem:[#allocation2 + $0x20] sm:$0xf]
    %v46 = vld [vmem:[#allocation2 + $0x24] sm:$0xff]
    %v47 = vld [vmem:[#allocation2 + $0x2c] sm:$0xf]
    %v48 = vld [vmem:[#allocation2 + $0x30] sm:$0xff]
    %v49 = vld [vmem:[#allocation2 + $0x38] sm:$0xf]
    %v50 = vld [vmem:[#allocation2 + $0x3c] sm:$0xff]
    %v51 = vld [vmem:[#allocation2 + $0x44] sm:$0xf]
    %v52 = vld [vmem:[#allocation2 + $0x48] sm:$0xff]
    %v53 = vld [vmem:[#allocation2 + $0x50] sm:$0xf]
    %v54 = vld [vmem:[#allocation2 + $0x54] sm:$0xff]
    %v55 = vld [vmem:[#allocation2 + $0x5c] sm:$0xf]
    %v56 = vld [vmem:[#allocation2 + $0x60] sm:$0xff]
    %v57 = vld [vmem:[#allocation2 + $0x68] sm:$0xf]
    %v58 = vld [vmem:[#allocation2 + $0x6c] sm:$0xff]
    %v59 = vld [vmem:[#allocation2 + $0x74] sm:$0xf]
    %v60 = vld [vmem:[#allocation2 + $0x78] sm:$0xff]
    %v61 = vld [vmem:[#allocation2 + $0x80] sm:$0xf]
    %v62 = vld [vmem:[#allocation2 + $0x84] sm:$0xff]
    %v63 = vld [vmem:[#allocation2 + $0x8c] sm:$0xf]
    %v64 = vld [vmem:[#allocation2 + $0x90] sm:$0xff]
    %v65 = vld [vmem:[#allocation2 + $0x98] sm:$0xf]
    %v66 = vld [vmem:[#allocation2 + $0x9c] sm:$0xff]
    %v67 = vld [vmem:[#allocation2 + $0xa4] sm:$0xf]
    %v68 = vld [vmem:[#allocation2 + $0xa8] sm:$0xff]
    %v69 = vld [vmem:[#allocation2 + $0xb0] sm:$0xf]
    %v70 = vld [vmem:[#allocation2 + $0xb4] sm:$0xff]
    %v71 = vld [vmem:[#allocation2 + $0xbc] sm:$0xf]
    %v72 = vld [vmem:[#allocation2 + $0xc0] sm:$0xff]
    %v73 = vld [vmem:[#allocation2 + $0xc8] sm:$0xf]
    %v74 = vld [vmem:[#allocation2 + $0xcc] sm:$0xff]
    %v75 = vld [vmem:[#allocation2 + $0xd4] sm:$0xf]
    %v76 = vld [vmem:[#allocation2 + $0xd8] sm:$0xff]
    %v77 = vld [vmem:[#allocation2 + $0xe0] sm:$0xf]
    %v78 = vld [vmem:[#allocation2 + $0xe4] sm:$0xff]
    %v79 = vld [vmem:[#allocation2 + $0xec] sm:$0xf]
    %v80 = vld [vmem:[#allocation2 + $0xf0] sm:$0xff]
    %v81 = vld [vmem:[#allocation2 + $0xf8] sm:$0xf]
    %v82 = vld [vmem:[#allocation2 + $0xfc] sm:$0xff]
    %v83 = vld [vmem:[#allocation2 + $0x104] sm:$0xf]
    %v84 = vld [vmem:[#allocation2 + $0x108] sm:$0xff]
    %v85 = vld [vmem:[#allocation2 + $0x110] sm:$0xf]
    %v86 = vld [vmem:[#allocation2 + $0x114] sm:$0xff]
    %v87 = vld [vmem:[#allocation2 + $0x11c] sm:$0xf]
    %v88 = vld [vmem:[#allocation2 + $0x120] sm:$0xff]
    %v89 = vld [vmem:[#allocation2 + $0x128] sm:$0xf]
    %v90 = vld [vmem:[#allocation2 + $0x12c] sm:$0xff]
    %v91 = vld [vmem:[#allocation2 + $0x134] sm:$0xf]
    %v92 = vld [vmem:[#allocation2 + $0x138] sm:$0xff]
    %v93 = vld [vmem:[#allocation2 + $0x140] sm:$0xf]
    %v94 = vld [vmem:[#allocation2 + $0x144] sm:$0xff]
    %v95 = vld [vmem:[#allocation2 + $0x14c] sm:$0xf]
    %v96 = vld [vmem:[#allocation2 + $0x150] sm:$0xff]
    %v97 = vld [vmem:[#allocation2 + $0x158] sm:$0xf]
    %v98 = vld [vmem:[#allocation2 + $0x15c] sm:$0xff]
    %v99 = vld [vmem:[#allocation2 + $0x164] sm:$0xf]
    %v100 = vld [vmem:[#allocation2 + $0x168] sm:$0xff]
    %v101 = vld [vmem:[#allocation2 + $0x170] sm:$0xf]
    %v102 = vld [vmem:[#allocation2 + $0x174] sm:$0xff]
    %v103 = vld [vmem:[#allocation2 + $0x17c] sm:$0xf]
    %v106 = vunpack.c.l.b16 %v38
    %v107 = vunpack.c.h.b16 %v38
    %v108 = vunpack.c.l.b16 %v39
    %v109 = vunpack.c.h.b16 %v39
    %v110 = vpack.c.b16 %v108, %v106
    %v111 = vpack.c.b16 %v109, %v107
    %v178 = vunpack.c.l.b16 %v40
    %v179 = vunpack.c.h.b16 %v40
    %v180 = vunpack.c.l.b16 %v41
    %v181 = vunpack.c.l.b16 %v42
    %v182 = vunpack.c.h.b16 %v42
    %v183 = vunpack.c.l.b16 %v43
    %v184 = vunpack.c.l.b16 %v44
    %v185 = vunpack.c.h.b16 %v44
    %v186 = vunpack.c.l.b16 %v45
    %v187 = vunpack.c.l.b16 %v46
    %v188 = vunpack.c.h.b16 %v46
    %v189 = vunpack.c.l.b16 %v47
    %v190 = vunpack.c.l.b16 %v48
    %v191 = vunpack.c.h.b16 %v48
    %v192 = vunpack.c.l.b16 %v49
    %v193 = vunpack.c.l.b16 %v50
    %v194 = vunpack.c.h.b16 %v50
    %v195 = vunpack.c.l.b16 %v51
    %v196 = vunpack.c.l.b16 %v52
    %v197 = vunpack.c.h.b16 %v52
    %v198 = vunpack.c.l.b16 %v53
    %v199 = vunpack.c.l.b16 %v54
    %v200 = vunpack.c.h.b16 %v54
    %v201 = vunpack.c.l.b16 %v55
    %v202 = vunpack.c.l.b16 %v56
    %v203 = vunpack.c.h.b16 %v56
    %v204 = vunpack.c.l.b16 %v57
    %v205 = vunpack.c.l.b16 %v58
    %v206 = vunpack.c.h.b16 %v58
    %v207 = vunpack.c.l.b16 %v59
    %v208 = vunpack.c.l.b16 %v60
    %v209 = vunpack.c.h.b16 %v60
    %v210 = vunpack.c.l.b16 %v61
    %v211 = vunpack.c.l.b16 %v62
    %v212 = vunpack.c.h.b16 %v62
    %v213 = vunpack.c.l.b16 %v63
    %v214 = vunpack.c.l.b16 %v64
    %v215 = vunpack.c.h.b16 %v64
    %v216 = vunpack.c.l.b16 %v65
    %v217 = vunpack.c.l.b16 %v66
    %v218 = vunpack.c.h.b16 %v66
    %v219 = vunpack.c.l.b16 %v67
    %v220 = vunpack.c.l.b16 %v68
    %v221 = vunpack.c.h.b16 %v68
    %v222 = vunpack.c.l.b16 %v69
    %v223 = vunpack.c.l.b16 %v70
    %v224 = vunpack.c.h.b16 %v70
    %v225 = vunpack.c.l.b16 %v71
    %v226 = vunpack.c.l.b16 %v72
    %v227 = vunpack.c.h.b16 %v72
    %v228 = vunpack.c.l.b16 %v73
    %v229 = vunpack.c.l.b16 %v74
    %v230 = vunpack.c.h.b16 %v74
    %v231 = vunpack.c.l.b16 %v75
    %v232 = vunpack.c.l.b16 %v76
    %v233 = vunpack.c.h.b16 %v76
    %v234 = vunpack.c.l.b16 %v77
    %v235 = vunpack.c.l.b16 %v78
    %v236 = vunpack.c.h.b16 %v78
    %v237 = vunpack.c.l.b16 %v79
    %v238 = vunpack.c.l.b16 %v80
    %v239 = vunpack.c.h.b16 %v80
    %v240 = vunpack.c.l.b16 %v81
    %v241 = vunpack.c.l.b16 %v82
    %v242 = vunpack.c.h.b16 %v82
    %v243 = vunpack.c.l.b16 %v83
    %v244 = vunpack.c.l.b16 %v84
    %v245 = vunpack.c.h.b16 %v84
    %v246 = vunpack.c.l.b16 %v85
    %v247 = vunpack.c.l.b16 %v86
    %v248 = vunpack.c.h.b16 %v86
    %v249 = vunpack.c.l.b16 %v87
    %v250 = vunpack.c.l.b16 %v88
    %v251 = vunpack.c.h.b16 %v88
    %v252 = vunpack.c.l.b16 %v89
    %v253 = vunpack.c.l.b16 %v90
    %v254 = vunpack.c.h.b16 %v90
    %v255 = vunpack.c.l.b16 %v91
    %v256 = vunpack.c.l.b16 %v92
    %v257 = vunpack.c.h.b16 %v92
    %v258 = vunpack.c.l.b16 %v93
    %v259 = vunpack.c.l.b16 %v94
    %v260 = vunpack.c.h.b16 %v94
    %v261 = vunpack.c.l.b16 %v95
    %v262 = vunpack.c.l.b16 %v96
    %v263 = vunpack.c.h.b16 %v96
    %v264 = vunpack.c.l.b16 %v97
    %v265 = vunpack.c.l.b16 %v98
    %v266 = vunpack.c.h.b16 %v98
    %v267 = vunpack.c.l.b16 %v99
    %v268 = vunpack.c.l.b16 %v100
    %v269 = vunpack.c.h.b16 %v100
    %v270 = vunpack.c.l.b16 %v101
    %v271 = vunpack.c.l.b16 %v102
    %v272 = vunpack.c.h.b16 %v102
    %v273 = vunpack.c.l.b16 %v103
    %v274 = vpack.c.b16 %v181, %v178
    %v275 = vpack.c.b16 %v182, %v179
    %v276 = vpack.c.b16 %v183, %v180
    %v277 = vpack.c.b16 %v187, %v184
    %v278 = vpack.c.b16 %v188, %v185
    %v279 = vpack.c.b16 %v189, %v186
    %v280 = vpack.c.b16 %v193, %v190
    %v281 = vpack.c.b16 %v194, %v191
    %v282 = vpack.c.b16 %v195, %v192
    %v283 = vpack.c.b16 %v199, %v196
    %v284 = vpack.c.b16 %v200, %v197
    %v285 = vpack.c.b16 %v201, %v198
    %v286 = vpack.c.b16 %v205, %v202
    %v287 = vpack.c.b16 %v206, %v203
    %v288 = vpack.c.b16 %v207, %v204
    %v289 = vpack.c.b16 %v211, %v208
    %v290 = vpack.c.b16 %v212, %v209
    %v291 = vpack.c.b16 %v213, %v210
    %v292 = vpack.c.b16 %v217, %v214
    %v293 = vpack.c.b16 %v218, %v215
    %v294 = vpack.c.b16 %v219, %v216
    %v295 = vpack.c.b16 %v223, %v220
    %v296 = vpack.c.b16 %v224, %v221
    %v297 = vpack.c.b16 %v225, %v222
    %v298 = vpack.c.b16 %v229, %v226
    %v299 = vpack.c.b16 %v230, %v227
    %v300 = vpack.c.b16 %v231, %v228
    %v301 = vpack.c.b16 %v235, %v232
    %v302 = vpack.c.b16 %v236, %v233
    %v303 = vpack.c.b16 %v237, %v234
    %v304 = vpack.c.b16 %v241, %v238
    %v305 = vpack.c.b16 %v242, %v239
    %v306 = vpack.c.b16 %v243, %v240
    %v307 = vpack.c.b16 %v247, %v244
    %v308 = vpack.c.b16 %v248, %v245
    %v309 = vpack.c.b16 %v249, %v246
    %v310 = vpack.c.b16 %v253, %v250
    %v311 = vpack.c.b16 %v254, %v251
    %v312 = vpack.c.b16 %v255, %v252
    %v313 = vpack.c.b16 %v259, %v256
    %v314 = vpack.c.b16 %v260, %v257
    %v315 = vpack.c.b16 %v261, %v258
    %v316 = vpack.c.b16 %v265, %v262
    %v317 = vpack.c.b16 %v266, %v263
    %v318 = vpack.c.b16 %v267, %v264
    %v319 = vpack.c.b16 %v271, %v268
    %v320 = vpack.c.b16 %v272, %v269
    %v321 = vpack.c.b16 %v273, %v270
    %370 = vmatprep.subr.bf16.mxu0 %v275
    %371 = vmatpush1.bf16.msra.mxu0 %v274
    %372 = vmatprep.subr.bf16.mxu0 %v278
    %373 = vmatpush1.bf16.msra.mxu0 %v277
    %374 = vmatprep.subr.bf16.mxu0 %v281
    %375 = vmatpush1.bf16.msra.mxu0 %v280
    %376 = vmatprep.subr.bf16.mxu0 %v284
    %377 = vmatpush1.bf16.msra.mxu0 %v283
    %378 = vmatprep.subr.bf16.mxu0 %v287
    %379 = vmatpush1.bf16.msra.mxu0 %v286
    %380 = vmatprep.subr.bf16.mxu0 %v290
    %381 = vmatpush1.bf16.msra.mxu0 %v289
    %382 = vmatprep.subr.bf16.mxu0 %v293
    %383 = vmatpush1.bf16.msra.mxu0 %v292
    %384 = vmatprep.subr.bf16.mxu0 %v296
    %385 = vmatpush1.bf16.msra.mxu0 %v295
    %386 = vmatprep.subr.bf16.mxu0 %v299
    %387 = vmatpush1.bf16.msra.mxu0 %v298
    %388 = vmatprep.subr.bf16.mxu0 %v302
    %389 = vmatpush1.bf16.msra.mxu0 %v301
    %390 = vmatprep.subr.bf16.mxu0 %v305
    %391 = vmatpush1.bf16.msra.mxu0 %v304
    %392 = vmatprep.subr.bf16.mxu0 %v308
    %393 = vmatpush1.bf16.msra.mxu0 %v307
    %394 = vmatprep.subr.bf16.mxu0 %v311
    %395 = vmatpush1.bf16.msra.mxu0 %v310
    %396 = vmatprep.subr.bf16.mxu0 %v314
    %397 = vmatpush1.bf16.msra.mxu0 %v313
    %398 = vmatprep.subr.bf16.mxu0 %v317
    %399 = vmatpush1.bf16.msra.mxu0 %v316
    %400 = vmatprep.subr.bf16.mxu0 %v320
    %401 = vmatpush1.bf16.msra.mxu0 %v319
    %402 = vmatprep.mubr.bf16.mxu0 %v111
    %403 = vmatmul.mubr.bf16.gmra.mrb[0].mxu0 %v110
    %v404 = vpop.f32.mrb[0].mxu0
    %v405 = vadd.f32 0.0, %v404
    %v406 = vpop.f32.mrb[0].mxu0
    %v407 = vadd.f32 0.0, %v406
    %v408 = vpop.f32.mrb[0].mxu0
    %v409 = vadd.f32 0.0, %v408
    %v410 = vpop.f32.mrb[0].mxu0
    %v411 = vadd.f32 0.0, %v410
    %412 = vdwg.mxu0
    %413 = vmatprep.subr.bf16.mxu0 0
    %414 = vmatpush1.bf16.msra.mxu0 %v276
    %415 = vmatprep.subr.bf16.mxu0 0
    %416 = vmatpush1.bf16.msra.mxu0 %v279
    %417 = vmatprep.subr.bf16.mxu0 0
    %418 = vmatpush1.bf16.msra.mxu0 %v282
    %419 = vmatprep.subr.bf16.mxu0 0
    %420 = vmatpush1.bf16.msra.mxu0 %v285
    %421 = vmatprep.subr.bf16.mxu0 0
    %422 = vmatpush1.bf16.msra.mxu0 %v288
    %423 = vmatprep.subr.bf16.mxu0 0
    %424 = vmatpush1.bf16.msra.mxu0 %v291
    %425 = vmatprep.subr.bf16.mxu0 0
    %426 = vmatpush1.bf16.msra.mxu0 %v294
    %427 = vmatprep.subr.bf16.mxu0 0
    %428 = vmatpush1.bf16.msra.mxu0 %v297
    %429 = vmatprep.subr.bf16.mxu0 0
    %430 = vmatpush1.bf16.msra.mxu0 %v300
    %431 = vmatprep.subr.bf16.mxu0 0
    %432 = vmatpush1.bf16.msra.mxu0 %v303
    %433 = vmatprep.subr.bf16.mxu0 0
    %434 = vmatpush1.bf16.msra.mxu0 %v306
    %435 = vmatprep.subr.bf16.mxu0 0
    %436 = vmatpush1.bf16.msra.mxu0 %v309
    %437 = vmatprep.subr.bf16.mxu0 0
    %438 = vmatpush1.bf16.msra.mxu0 %v312
    %439 = vmatprep.subr.bf16.mxu0 0
    %440 = vmatpush1.bf16.msra.mxu0 %v315
    %441 = vmatprep.subr.bf16.mxu0 0
    %442 = vmatpush1.bf16.msra.mxu0 %v318
    %443 = vmatprep.subr.bf16.mxu0 0
    %444 = vmatpush1.bf16.msra.mxu0 %v321
    %445 = vmatprep.mubr.bf16.mxu0 %v111
    %446 = vmatmul.mubr.bf16.gmra.mrb[0].mxu0 %v110
    %v447 = vpop.f32.mrb[0].mxu0
    %v448 = vadd.f32 0.0, %v447
    %v449 = vpop.f32.mrb[0].mxu0
    %v450 = vpop.f32.mrb[0].mxu0
    %v451 = vadd.f32 0.0, %v450
    %v452 = vpop.f32.mrb[0].mxu0
    %453 = vdwg.mxu0
    %v454 = vld [vmem:[%s4] sm:$0x1]
    %v456 = vlaneseq
    %v457 = vshrl.u32 %v456, 7
    %v458 = vsub.s32 0, %v457
    %v459 = vrot.slane %v454, %v458
    %v461 = vadd.f32 %v405, %v459
    %v462 = vadd.f32 %v409, %v459
    %v463 = vxor.u32 %v461, 2147483648
    %v464 = vxor.u32 %v462, 2147483648
    %v465 = vmul.f32 %v463, 1.442695
    %v466 = vpow.pop %v465
    %v467 = vmul.f32 %v464, 1.442695
    %v468 = vpow.pop %v467
    %v469 = vadd.f32 %v466, 1.0
    %v470 = vadd.f32 %v468, 1.0
    %v471 = vrcp.pop %v469
    %v472 = vmul.f32 1.0, %v471
    %v473 = vrcp.pop %v470
    %v474 = vmul.f32 1.0, %v473
    %v475 = vxor.u32 %v407, 2147483648
    %v476 = vxor.u32 %v411, 2147483648
    %v477 = vmul.f32 %v475, 1.442695
    %v478 = vpow.pop %v477
    %v479 = vmul.f32 %v476, 1.442695
    %v480 = vpow.pop %v479
    %v481 = vadd.f32 %v478, 1.0
    %v482 = vadd.f32 %v480, 1.0
    %v483 = vrcp.pop %v481
    %v484 = vmul.f32 1.0, %v483
    %v485 = vrcp.pop %v482
    %v486 = vmul.f32 1.0, %v485
    %v487 = vmul.f32 %v484, %v36
    %v488 = vmul.f32 %v486, %v37
    %v489 = vpack.c.bf16 %v488, %v487
    %v490 = vld [vmem:[%s3] sm:$0xf]
    %v491 = vld [vmem:[%s3 + $0x4] sm:$0xf]
    %v492 = vld [vmem:[%s3 + $0x8] sm:$0xf]
    %v493 = vld [vmem:[%s3 + $0xc] sm:$0xf]
    %v494 = vld [vmem:[%s3 + $0x10] sm:$0xf]
    %v495 = vld [vmem:[%s3 + $0x14] sm:$0xf]
    %v496 = vld [vmem:[%s3 + $0x18] sm:$0xf]
    %v497 = vld [vmem:[%s3 + $0x1c] sm:$0xf]
    %v498 = vld [vmem:[%s3 + $0x20] sm:$0xf]
    %v499 = vld [vmem:[%s3 + $0x24] sm:$0xf]
    %v500 = vld [vmem:[%s3 + $0x28] sm:$0xf]
    %v501 = vld [vmem:[%s3 + $0x2c] sm:$0xf]
    %v502 = vld [vmem:[%s3 + $0x30] sm:$0xf]
    %v503 = vld [vmem:[%s3 + $0x34] sm:$0xf]
    %v504 = vld [vmem:[%s3 + $0x38] sm:$0xf]
    %v505 = vld [vmem:[%s3 + $0x3c] sm:$0xf]
    %v522 = vunpack.c.l.b16 %v490
    %v523 = vunpack.c.l.b16 %v491
    %v524 = vunpack.c.l.b16 %v492
    %v525 = vunpack.c.l.b16 %v493
    %v526 = vunpack.c.l.b16 %v494
    %v527 = vunpack.c.l.b16 %v495
    %v528 = vunpack.c.l.b16 %v496
    %v529 = vunpack.c.l.b16 %v497
    %v530 = vunpack.c.l.b16 %v498
    %v531 = vunpack.c.l.b16 %v499
    %v532 = vunpack.c.l.b16 %v500
    %v533 = vunpack.c.l.b16 %v501
    %v534 = vunpack.c.l.b16 %v502
    %v535 = vunpack.c.l.b16 %v503
    %v536 = vunpack.c.l.b16 %v504
    %v537 = vunpack.c.l.b16 %v505
    %v538 = vpack.c.b16 %v523, %v522
    %v539 = vpack.c.b16 %v525, %v524
    %v540 = vpack.c.b16 %v527, %v526
    %v541 = vpack.c.b16 %v529, %v528
    %v542 = vpack.c.b16 %v531, %v530
    %v543 = vpack.c.b16 %v533, %v532
    %v544 = vpack.c.b16 %v535, %v534
    %v545 = vpack.c.b16 %v537, %v536
    %554 = vmatprep.subr.bf16.mxu0 0
    %555 = vmatpush1.bf16.msra.mxu0 %v538
    %556 = vmatprep.subr.bf16.mxu0 0
    %557 = vmatpush1.bf16.msra.mxu0 %v539
    %558 = vmatprep.subr.bf16.mxu0 0
    %559 = vmatpush1.bf16.msra.mxu0 %v540
    %560 = vmatprep.subr.bf16.mxu0 0
    %561 = vmatpush1.bf16.msra.mxu0 %v541
    %562 = vmatprep.subr.bf16.mxu0 0
    %563 = vmatpush1.bf16.msra.mxu0 %v542
    %564 = vmatprep.subr.bf16.mxu0 0
    %565 = vmatpush1.bf16.msra.mxu0 %v543
    %566 = vmatprep.subr.bf16.mxu0 0
    %567 = vmatpush1.bf16.msra.mxu0 %v544
    %568 = vmatprep.subr.bf16.mxu0 0
    %569 = vmatpush1.bf16.msra.mxu0 %v545
    %570 = vmatprep.subr.bf16.mxu0 0
    %571 = vmatpush1.bf16.msra.mxu0 0
    %572 = vmatprep.subr.bf16.mxu0 0
    %573 = vmatpush1.bf16.msra.mxu0 0
    %574 = vmatprep.subr.bf16.mxu0 0
    %575 = vmatpush1.bf16.msra.mxu0 0
    %576 = vmatprep.subr.bf16.mxu0 0
    %577 = vmatpush1.bf16.msra.mxu0 0
    %578 = vmatprep.subr.bf16.mxu0 0
    %579 = vmatpush1.bf16.msra.mxu0 0
    %580 = vmatprep.subr.bf16.mxu0 0
    %581 = vmatpush1.bf16.msra.mxu0 0
    %582 = vmatprep.subr.bf16.mxu0 0
    %583 = vmatpush1.bf16.msra.mxu0 0
    %584 = vmatprep.subr.bf16.mxu0 0
    %585 = vmatpush1.bf16.msra.mxu0 0
    %586 = vmatprep.mubr.bf16.mxu0 0
    %587 = vmatmul.mubr.bf16.gmra.mrb[0].mxu0 %v489
    %v588 = vpop.f32.mrb[0].mxu0
    %v589 = vadd.f32 0.0, %v588
    %v590 = vpop.f32.mrb[0].mxu0
    %v591 = vpop.f32.mrb[0].mxu0
    %v592 = vadd.f32 0.0, %v591
    %v593 = vpop.f32.mrb[0].mxu0
    %594 = vdwg.mxu0
    %v595 = vadd.f32 %v448, %v589
    %v596 = vadd.f32 %v451, %v592
    %v597 = vtanh.pop %v595
    %v598 = vtanh.pop %v596
    %v599 = vsub.f32 %v597, %v36
    %v600 = vsub.f32 %v598, %v37
    %v601 = vmul.f32 %v472, %v599
    %v602 = vmul.f32 %v474, %v600
    %v603 = vadd.f32 %v36, %v601
    %v604 = vadd.f32 %v37, %v602
    %605 = vst [vmem:[#allocation5] sm:$0xff] %v603
    %606 = vst [vmem:[#allocation5 + $0x8] sm:$0xff] %v604
    // Predicated region
    $region26: #{gru_gate_forward.1} parent=1 // pred_check
      _
    $region27: #{gru_gate_forward.1} parent=1 // pred_check_branch
      %608 = sbr.rel (0) target = $region29
    $region28: #{gru_gate_forward.1} parent=1 // pred_region
      %s610 = ssub.s32 256, 256
      %611 = vsyncadd [#allocation4], %s610
      %s612 = sshll.u32 [#allocation5], 4
      %s613 = int_to_ptr.vmem [resolvable:$true] %s612
      %618 = dma.vmem_to_hbm [thread:$0]  %s613, 256, %s5, [#allocation4], 128, 128, 8
    $region29: #{gru_gate_forward.1} parent=1 // pred_fallthru
      _
    // Predicated region
    $region30: #{gru_gate_forward.1} parent=1 // pred_check
      _
    $region31: #{gru_gate_forward.1} parent=1 // pred_check_branch
      %620 = sbr.rel (0) target = $region33
    $region32: #{gru_gate_forward.1} parent=1 // pred_region
      %621 = dma.done [#allocation4], 256
    $region33: #{gru_gate_forward.1} parent=1 // pred_fallthru
      _
    %622 = vsyncpa [#allocation3], 1
    %623 = vsyncpa [#allocation4], 1

</llo_original>
